<compile_context>
chip_gen: v6e
topology: v6e:2x2x1
jax: 0.10.0
libtpu: 0.0.40
codegen_flags: <defaults>
</compile_context>

<pallas_src>
import jax
import jax.numpy as jnp
from jax.experimental import pallas as pl
from jax.experimental.pallas import tpu as pltpu

D_X = 140
D_Z = 100
D_IN = D_X + D_Z        # 240
H1 = 256
H2 = 256
D_OUT = 100

TILE_B = 2048           # max batch-tile size (rows per grid step)


def _round_up(n, m):
    return ((n + m - 1) // m) * m


def projection_net_kernel(x_ref, z_ref, wx_ref, wz_ref, b_ref, o_ref):
    # Folded affine map: out = x @ Wx + z @ Wz + b
    # Two small MXU passes per batch tile, f32 accumulation, direct store.
    acc = jnp.dot(x_ref[...], wx_ref[...], preferred_element_type=jnp.float32)
    acc = acc + jnp.dot(z_ref[...], wz_ref[...],
                        preferred_element_type=jnp.float32)
    o_ref[...] = (acc + b_ref[...]).astype(o_ref.dtype)


def fold_params(params):
    """Fold Linear(240,256) -> Linear(256,256) -> Linear(256,100) into a single
    affine map split along the concat boundary (valid: no nonlinearity)."""
    w1, b1, w2, b2, w3, b3 = params
    hi = jax.lax.Precision.HIGHEST
    w23 = jnp.dot(w2, w3, precision=hi)            # (256, 100)
    w123 = jnp.dot(w1, w23, precision=hi)          # (240, 100)
    wx = w123[:D_X]                                # (140, 100)
    wz = w123[D_X:]                                # (100, 100)
    b = jnp.dot(jnp.dot(b1, w2, precision=hi) + b2, w3, precision=hi) + b3
    return wx, wz, b.reshape(1, D_OUT)


def projection_net(x, z, params, tile_b=TILE_B):
    """x: (B, 140), z: (B, 100) -> (B, 100). All float32."""
    B = x.shape[0]
    wx, wz, b = fold_params(params)

    # Batch tile: 8-aligned, capped at tile_b, and the batch is split at least
    # two ways so both v7x TensorCores get a tile (harmless on v5e/v6e).
    tb = min(tile_b, max(8, _round_up(pl.cdiv(B, 2), 8)))
    n_tiles = pl.cdiv(B, tb)   # partial edge block is masked by Pallas

    flops = 2 * B * (D_X * D_OUT + D_Z * D_OUT)
    bytes_accessed = 4 * (B * (D_X + D_Z + D_OUT)
                          + D_X * D_OUT + D_Z * D_OUT + D_OUT)

    # Weights/bias: constant index_map -> DMA'd once, VMEM-resident.
    resident = lambda shape: pl.BlockSpec(shape, lambda i: (0, 0))

    return pl.pallas_call(
        projection_net_kernel,
        out_shape=jax.ShapeDtypeStruct((B, D_OUT), jnp.float32),
        grid_spec=pltpu.PrefetchScalarGridSpec(
            num_scalar_prefetch=0,
            grid=(n_tiles,),
            in_specs=[
                pl.BlockSpec((tb, D_X), lambda i: (i, 0)),   # x tile
                pl.BlockSpec((tb, D_Z), lambda i: (i, 0)),   # z tile
                resident((D_X, D_OUT)),                      # Wx (folded)
                resident((D_Z, D_OUT)),                      # Wz (folded)
                resident((1, D_OUT)),                        # b  (folded)
            ],
            out_specs=pl.BlockSpec((tb, D_OUT), lambda i: (i, 0)),
        ),
        compiler_params=pltpu.CompilerParams(
            dimension_semantics=("parallel",),   # batch tiles across v7x cores
            vmem_limit_bytes=32 * 1024 * 1024,
        ),
        cost_estimate=pl.CostEstimate(
            flops=flops, transcendentals=0, bytes_accessed=bytes_accessed),
    )(x, z, wx, wz, b)


def init_params(key):
    """Deterministic parameter init (PyTorch-Linear-style uniform ranges)."""
    ks = jax.random.split(key, 6)

    def linear(kw, kb, fan_in, fan_out):
        bound = 1.0 / jnp.sqrt(fan_in)
        # stored as (in, out) == transpose of torch's (out, in) weight
        w = jax.random.uniform(kw, (fan_in, fan_out), jnp.float32, -bound, bound)
        b = jax.random.uniform(kb, (fan_out,), jnp.float32, -bound, bound)
        return w, b

    w1, b1 = linear(ks[0], ks[1], D_IN, H1)
    w2, b2 = linear(ks[2], ks[3], H1, H2)
    w3, b3 = linear(ks[4], ks[5], H2, D_OUT)
    return (w1, b1, w2, b2, w3, b3)


def reference(x, z, params):
    """Layered f32 reference (matches the torch module's forward)."""
    w1, b1, w2, b2, w3, b3 = params
    hi = jax.lax.Precision.HIGHEST
    y = jnp.dot(jnp.concatenate([x, z], axis=1), w1, precision=hi) + b1
    y = jnp.dot(y, w2, precision=hi) + b2
    y = jnp.dot(y, w3, precision=hi) + b3
    return y


if __name__ == "__main__":
    key = jax.random.PRNGKey(0)
    k_params, k_x, k_z = jax.random.split(key, 3)

    B = 8
    params = init_params(k_params)
    x = jax.random.normal(k_x, (B, D_X), jnp.float32)
    z = jax.random.normal(k_z, (B, D_Z), jnp.float32)

    out = projection_net(x, z, params)
    jax.block_until_ready(out)

    ref = reference(x, z, params)
    assert out.shape == (B, D_OUT)
    assert jnp.allclose(out, ref, atol=1e-4, rtol=1e-4)

    # Batch that is not a tile multiple: exercises the masked partial edge
    # block (no explicit batch padding anymore) and the >=2-tile split.
    B2 = 1000
    x2 = jax.random.normal(k_x, (B2, D_X), jnp.float32)
    z2 = jax.random.normal(k_z, (B2, D_Z), jnp.float32)
    out2 = projection_net(x2, z2, params)
    jax.block_until_ready(out2)
    assert out2.shape == (B2, D_OUT)
    assert jnp.allclose(out2, reference(x2, z2, params), atol=1e-4, rtol=1e-4)

    print("KERNEL_OK")
</pallas_src>

<mosaic_0001>
module attributes {stable_mosaic.version = 11 : i64} {
  func.func @projection_net_kernel(%arg0: i32, %arg1: memref<8x140xf32, #tpu.memory_space<vmem>>, %arg2: memref<8x100xf32, #tpu.memory_space<vmem>>, %arg3: memref<140x100xf32, #tpu.memory_space<vmem>>, %arg4: memref<100x100xf32, #tpu.memory_space<vmem>>, %arg5: memref<1x100xf32, #tpu.memory_space<vmem>>, %arg6: memref<8x100xf32, #tpu.memory_space<vmem>>) attributes {dimension_semantics = [#tpu.dimension_semantics<parallel>], iteration_bounds = array<i64: 1>, scalar_prefetch = 0 : i64, scratch_operands = 0 : i64, tpu.core_type = #tpu.core_type<tc>, window_params = [{transform_indices = @transform_0, window_bounds = array<i64: 8, 140>}, {transform_indices = @transform_1, window_bounds = array<i64: 8, 100>}, {pipeline_mode = #tpu.pipeline_mode<synchronous>, transform_indices = @transform_2, window_bounds = array<i64: 140, 100>}, {pipeline_mode = #tpu.pipeline_mode<synchronous>, transform_indices = @transform_3, window_bounds = array<i64: 100, 100>}, {pipeline_mode = #tpu.pipeline_mode<synchronous>, transform_indices = @transform_4, window_bounds = array<i64: 1, 100>}, {transform_indices = @transform_5, window_bounds = array<i64: 8, 100>}]} {
    %c0 = arith.constant 0 : index
    %c0_0 = arith.constant 0 : index
    %0 = vector.load %arg1[%c0, %c0_0] : memref<8x140xf32, #tpu.memory_space<vmem>>, vector<8x140xf32>
    %c0_1 = arith.constant 0 : index
    %c0_2 = arith.constant 0 : index
    %1 = vector.load %arg3[%c0_1, %c0_2] : memref<140x100xf32, #tpu.memory_space<vmem>>, vector<140x100xf32>
    %cst = arith.constant dense<0.000000e+00> : vector<8x100xf32>
    %2 = tpu.matmul %0, %1, %cst {dimension_numbers = #tpu.dot_dimension_numbers<[1], [0], [0], [1], [0, 0, 1, 1], [], []>} : vector<8x140xf32>, vector<140x100xf32>, vector<8x100xf32> -> vector<8x100xf32>
    %c0_3 = arith.constant 0 : index
    %c0_4 = arith.constant 0 : index
    %3 = vector.load %arg2[%c0_3, %c0_4] : memref<8x100xf32, #tpu.memory_space<vmem>>, vector<8x100xf32>
    %c0_5 = arith.constant 0 : index
    %c0_6 = arith.constant 0 : index
    %4 = vector.load %arg4[%c0_5, %c0_6] : memref<100x100xf32, #tpu.memory_space<vmem>>, vector<100x100xf32>
    %cst_7 = arith.constant dense<0.000000e+00> : vector<8x100xf32>
    %5 = tpu.matmul %3, %4, %cst_7 {dimension_numbers = #tpu.dot_dimension_numbers<[1], [0], [0], [1], [0, 0, 1, 1], [], []>} : vector<8x100xf32>, vector<100x100xf32>, vector<8x100xf32> -> vector<8x100xf32>
    %6 = arith.addf %2, %5 : vector<8x100xf32>
    %c0_8 = arith.constant 0 : index
    %c0_9 = arith.constant 0 : index
    %7 = vector.load %arg5[%c0_8, %c0_9] : memref<1x100xf32, #tpu.memory_space<vmem>>, vector<1x100xf32>
    %8 = vector.broadcast %7 : vector<1x100xf32> to vector<8x100xf32>
    %9 = arith.addf %6, %8 : vector<8x100xf32>
    %c0_10 = arith.constant 0 : index
    %c0_11 = arith.constant 0 : index
    %10 = vector.load %arg6[%c0_10, %c0_11] : memref<8x100xf32, #tpu.memory_space<vmem>>, vector<8x100xf32>
    tpu.vector_store %arg6[%c0_10, %c0_11], %9 {strides = array<i32>} : memref<8x100xf32, #tpu.memory_space<vmem>>, vector<8x100xf32>,
    return
  }
  func.func @transform_0(%arg0: i32) -> (i32, i32) {
    %c0_i32 = arith.constant 0 : i32
    %c0_i32_0 = arith.constant 0 : i32
    return %arg0, %c0_i32 : i32, i32
  }
  func.func @transform_1(%arg0: i32) -> (i32, i32) {
    %c0_i32 = arith.constant 0 : i32
    %c0_i32_0 = arith.constant 0 : i32
    return %arg0, %c0_i32 : i32, i32
  }
  func.func @transform_2(%arg0: i32) -> (i32, i32) {
    %c0_i32 = arith.constant 0 : i32
    %c0_i32_0 = arith.constant 0 : i32
    %c0_i32_1 = arith.constant 0 : i32
    return %c0_i32, %c0_i32_0 : i32, i32
  }
  func.func @transform_3(%arg0: i32) -> (i32, i32) {
    %c0_i32 = arith.constant 0 : i32
    %c0_i32_0 = arith.constant 0 : i32
    %c0_i32_1 = arith.constant 0 : i32
    return %c0_i32, %c0_i32_0 : i32, i32
  }
  func.func @transform_4(%arg0: i32) -> (i32, i32) {
    %c0_i32 = arith.constant 0 : i32
    %c0_i32_0 = arith.constant 0 : i32
    %c0_i32_1 = arith.constant 0 : i32
    return %c0_i32, %c0_i32_0 : i32, i32
  }
  func.func @transform_5(%arg0: i32) -> (i32, i32) {
    %c0_i32 = arith.constant 0 : i32
    %c0_i32_0 = arith.constant 0 : i32
    return %arg0, %c0_i32 : i32, i32
  }
}

</mosaic_0001>

<llo_original>
// kernel: tpu_custom_call.1
$region0: #{tpu_custom_call.1}
  #allocation0 [shape = 'u32[]', space=smem, size = 0x4, offset = 0x4, fixed_abs, tag = 'smem constant byte address 0x4 - core index']
  #allocation1 [shape = 'u32[144,128]{1,0:T(1,128)}', space=vmem, size = 0x12000, scoped, tag = 'internal scratch']
  %s0 = inlined_call_operand.hbm [shape: f32[8,140], index: 0, kind: input, shape index: {}]
  %s1 = inlined_call_operand.hbm [shape: f32[8,100], index: 1, kind: input, shape index: {}]
  %s2 = inlined_call_operand.hbm [shape: f32[140,100], index: 2, kind: input, shape index: {}]
  %s3 = inlined_call_operand.hbm [shape: f32[100,100], index: 3, kind: input, shape index: {}]
  %s4 = inlined_call_operand.vmem [shape: f32[1,100], index: 4, kind: input, shape index: {}]
  %s5 = inlined_call_operand.hbm [shape: f32[8,100], index: 5, kind: output, shape index: {}]
  %s6 = sld [smem:[#allocation0]]
  $region46: #{tpu_custom_call.1} parent=0
    _
  %s8 = ssub.s32 1, %s6
  %s9 = scalar_select 0, %s8, %s6
  $region1: #{tpu_custom_call.1} parent=0
    #allocation2 [shape = 'u8[8192]{0}', space=vmem, size = 0x2000, scoped, tag = 'input window, operand 0, single buffered']
    #allocation3 [shape = 's32[1]{0}', space=sflag, size = 0x4, scoped, tag = 'scoped memory for tpu_custom_call.1']
    #allocation4 [shape = 's32[1]{0}', space=sflag, size = 0x4, scoped, tag = 'scoped memory for tpu_custom_call.1']
    #allocation5 [shape = 'u8[4096]{0}', space=vmem, size = 0x1000, scoped, tag = 'input window, operand 1, single buffered']
    #allocation6 [shape = 's32[1]{0}', space=sflag, size = 0x4, scoped, tag = 'scoped memory for tpu_custom_call.1']
    #allocation7 [shape = 'u8[73728]{0}', space=vmem, size = 0x12000, scoped, tag = 'input window, operand 2, single buffered']
    #allocation8 [shape = 'u8[53248]{0}', space=vmem, size = 0xd000, scoped, tag = 'input window, operand 3, single buffered']
    #allocation9 [shape = 's32[1]{0}', space=sflag, size = 0x4, scoped, tag = 'scoped memory for tpu_custom_call.1']
    #allocation10 [shape = 'u8[4096]{0}', space=vmem, size = 0x1000, scoped, tag = 'output window, operand 0, single buffered']
    %10 = vsyncpa [#allocation3], 0
    %11 = vsyncpa [#allocation6], 0
    %12 = vsyncpa [#allocation9], 0
    %13 = vsyncpa [#allocation4], 0
    // Predicated region
    $region2: #{tpu_custom_call.1} parent=1 // pred_check
      _
    $region3: #{tpu_custom_call.1} parent=1 // pred_check_branch
      %15 = sbr.rel (0) target = $region5
    $region4: #{tpu_custom_call.1} parent=1 // pred_region
      %s17 = ssub.s32 256, 256
      %18 = vsyncadd [#allocation3], %s17
      %s20 = sshll.u32 [#allocation2], 4
      %s21 = int_to_ptr.vmem [resolvable:$true] %s20
      %23 = dma.hbm_to_vmem [thread:$0]  %s0, 256, %s21, [#allocation3]
    $region5: #{tpu_custom_call.1} parent=1 // pred_fallthru
      _
    // Predicated region
    $region6: #{tpu_custom_call.1} parent=1 // pred_check
      _
    $region7: #{tpu_custom_call.1} parent=1 // pred_check_branch
      %25 = sbr.rel (0) target = $region9
    $region8: #{tpu_custom_call.1} parent=1 // pred_region
      %s27 = ssub.s32 128, 128
      %28 = vsyncadd [#allocation6], %s27
      %s30 = sshll.u32 [#allocation5], 4
      %s31 = int_to_ptr.vmem [resolvable:$true] %s30
      %33 = dma.hbm_to_vmem [thread:$0]  %s1, 128, %s31, [#allocation6]
    $region9: #{tpu_custom_call.1} parent=1 // pred_fallthru
      _
    // Predicated region
    $region10: #{tpu_custom_call.1} parent=1 // pred_check
      _
    $region11: #{tpu_custom_call.1} parent=1 // pred_check_branch
      %35 = sbr.rel (0) target = $region13
    $region12: #{tpu_custom_call.1} parent=1 // pred_region
      %s37 = ssub.s32 2304, 2304
      %38 = vsyncadd [#allocation6], %s37
      %s39 = sshll.u32 [#allocation7], 4
      %s40 = int_to_ptr.vmem [resolvable:$true] %s39
      %45 = dma.hbm_to_vmem [thread:$0]  %s2, 2304, %s40, [#allocation6], 128, 128, 8
    $region13: #{tpu_custom_call.1} parent=1 // pred_fallthru
      _
    // Predicated region
    $region14: #{tpu_custom_call.1} parent=1 // pred_check
      _
    $region15: #{tpu_custom_call.1} parent=1 // pred_check_branch
      %47 = sbr.rel (0) target = $region17
    $region16: #{tpu_custom_call.1} parent=1 // pred_region
      %s49 = ssub.s32 1664, 1664
      %50 = vsyncadd [#allocation9], %s49
      %s51 = sshll.u32 [#allocation8], 4
      %s52 = int_to_ptr.vmem [resolvable:$true] %s51
      %57 = dma.hbm_to_vmem [thread:$0]  %s3, 1664, %s52, [#allocation9], 128, 128, 8
    $region17: #{tpu_custom_call.1} parent=1 // pred_fallthru
      _
    // Predicated region
    $region18: #{tpu_custom_call.1} parent=1 // pred_check
      _
    $region19: #{tpu_custom_call.1} parent=1 // pred_check_branch
      %59 = sbr.rel (0) target = $region21
    $region20: #{tpu_custom_call.1} parent=1 // pred_region
      _
    $region21: #{tpu_custom_call.1} parent=1 // pred_fallthru
      _
    // Predicated region
    $region22: #{tpu_custom_call.1} parent=1 // pred_check
      _
    $region23: #{tpu_custom_call.1} parent=1 // pred_check_branch
      %61 = sbr.rel (0) target = $region25
    $region24: #{tpu_custom_call.1} parent=1 // pred_region
      %62 = dma.done [#allocation3], 256
    $region25: #{tpu_custom_call.1} parent=1 // pred_fallthru
      _
    // Predicated region
    $region26: #{tpu_custom_call.1} parent=1 // pred_check
      _
    $region27: #{tpu_custom_call.1} parent=1 // pred_check_branch
      %64 = sbr.rel (0) target = $region29
    $region28: #{tpu_custom_call.1} parent=1 // pred_region
      %65 = dma.done [#allocation6], 128
    $region29: #{tpu_custom_call.1} parent=1 // pred_fallthru
      _
    // Predicated region
    $region30: #{tpu_custom_call.1} parent=1 // pred_check
      _
    $region31: #{tpu_custom_call.1} parent=1 // pred_check_branch
      %67 = sbr.rel (0) target = $region33
    $region32: #{tpu_custom_call.1} parent=1 // pred_region
      %68 = dma.done [#allocation6], 2304
    $region33: #{tpu_custom_call.1} parent=1 // pred_fallthru
      _
    // Predicated region
    $region34: #{tpu_custom_call.1} parent=1 // pred_check
      _
    $region35: #{tpu_custom_call.1} parent=1 // pred_check_branch
      %70 = sbr.rel (0) target = $region37
    $region36: #{tpu_custom_call.1} parent=1 // pred_region
      %71 = dma.done [#allocation9], 1664
    $region37: #{tpu_custom_call.1} parent=1 // pred_fallthru
      _
    %v72 = vld [vmem:[#allocation2] sm:$0xff]
    %v73 = vld [vmem:[#allocation2 + $0x8] sm:$0xff]
    %v74 = vld [vmem:[#allocation7] sm:$0xff]
    %v75 = vld [vmem:[#allocation7 + $0x8] sm:$0xff]
    %v76 = vld [vmem:[#allocation7 + $0x10] sm:$0xff]
    %v77 = vld [vmem:[#allocation7 + $0x18] sm:$0xff]
    %v78 = vld [vmem:[#allocation7 + $0x20] sm:$0xff]
    %v79 = vld [vmem:[#allocation7 + $0x28] sm:$0xff]
    %v80 = vld [vmem:[#allocation7 + $0x30] sm:$0xff]
    %v81 = vld [vmem:[#allocation7 + $0x38] sm:$0xff]
    %v82 = vld [vmem:[#allocation7 + $0x40] sm:$0xff]
    %v83 = vld [vmem:[#allocation7 + $0x48] sm:$0xff]
    %v84 = vld [vmem:[#allocation7 + $0x50] sm:$0xff]
    %v85 = vld [vmem:[#allocation7 + $0x58] sm:$0xff]
    %v86 = vld [vmem:[#allocation7 + $0x60] sm:$0xff]
    %v87 = vld [vmem:[#allocation7 + $0x68] sm:$0xff]
    %v88 = vld [vmem:[#allocation7 + $0x70] sm:$0xff]
    %v89 = vld [vmem:[#allocation7 + $0x78] sm:$0xff]
    %v90 = vld [vmem:[#allocation7 + $0x80] sm:$0xff]
    %v91 = vld [vmem:[#allocation7 + $0x88] sm:$0xf]
    %v92 = vld [vmem:[#allocation5] sm:$0xff]
    %v93 = vld [vmem:[#allocation8] sm:$0xff]
    %v94 = vld [vmem:[#allocation8 + $0x8] sm:$0xff]
    %v95 = vld [vmem:[#allocation8 + $0x10] sm:$0xff]
    %v96 = vld [vmem:[#allocation8 + $0x18] sm:$0xff]
    %v97 = vld [vmem:[#allocation8 + $0x20] sm:$0xff]
    %v98 = vld [vmem:[#allocation8 + $0x28] sm:$0xff]
    %v99 = vld [vmem:[#allocation8 + $0x30] sm:$0xff]
    %v100 = vld [vmem:[#allocation8 + $0x38] sm:$0xff]
    %v101 = vld [vmem:[#allocation8 + $0x40] sm:$0xff]
    %v102 = vld [vmem:[#allocation8 + $0x48] sm:$0xff]
    %v103 = vld [vmem:[#allocation8 + $0x50] sm:$0xff]
    %v104 = vld [vmem:[#allocation8 + $0x58] sm:$0xff]
    %v105 = vld [vmem:[#allocation8 + $0x60] sm:$0xf]
    %vm106 = vcmask 818176
    %v108 = vsel %vm106, %v92, 0
    %vm110 = vcmask 1043456
    %v112 = vsel %vm110, %v105, 0
    %114 = vmatprep.subr.mxu0 0.0
    %115 = vmatpush1.msra.mxu0 0.0
    %116 = vmatprep.subr.mxu0 0.0
    %117 = vmatpush1.msra.mxu0 0.0
    %118 = vmatprep.subr.mxu0 0.0
    %119 = vmatpush1.msra.mxu0 0.0
    %120 = vmatprep.subr.mxu0 0.0
    %121 = vmatpush1.msra.mxu0 %v112
    %122 = vmatprep.subr.mxu0 0.0
    %123 = vmatpush1.msra.mxu0 %v104
    %124 = vmatprep.subr.mxu0 0.0
    %125 = vmatpush1.msra.mxu0 %v103
    %126 = vmatprep.subr.mxu0 0.0
    %127 = vmatpush1.msra.mxu0 %v102
    %128 = vmatprep.subr.mxu0 0.0
    %129 = vmatpush1.msra.mxu0 %v101
    %130 = vmatprep.subr.mxu0 0.0
    %131 = vmatpush1.msra.mxu0 %v100
    %132 = vmatprep.subr.mxu0 0.0
    %133 = vmatpush1.msra.mxu0 %v99
    %134 = vmatprep.subr.mxu0 0.0
    %135 = vmatpush1.msra.mxu0 %v98
    %136 = vmatprep.subr.mxu0 0.0
    %137 = vmatpush1.msra.mxu0 %v97
    %138 = vmatprep.subr.mxu0 0.0
    %139 = vmatpush1.msra.mxu0 %v96
    %140 = vmatprep.subr.mxu0 0.0
    %141 = vmatpush1.msra.mxu0 %v95
    %142 = vmatprep.subr.mxu0 0.0
    %143 = vmatpush1.msra.mxu0 %v94
    %144 = vmatprep.subr.mxu0 0.0
    %145 = vmatpush1.msra.mxu0 %v93
    %146 = vmatprep.subr.mxu0 0.0
    %147 = vmatpush2.msra.mxu0 0.0
    %148 = vmatprep.subr.mxu0 0.0
    %149 = vmatpush2.msra.mxu0 0.0
    %150 = vmatprep.subr.mxu0 0.0
    %151 = vmatpush2.msra.mxu0 0.0
    %152 = vmatprep.subr.mxu0 0.0
    %153 = vmatpush2.msra.mxu0 0.0
    %154 = vmatprep.subr.mxu0 0.0
    %155 = vmatpush2.msra.mxu0 0.0
    %156 = vmatprep.subr.mxu0 0.0
    %157 = vmatpush2.msra.mxu0 0.0
    %158 = vmatprep.subr.mxu0 0.0
    %159 = vmatpush2.msra.mxu0 0.0
    %160 = vmatprep.subr.mxu0 0.0
    %161 = vmatpush2.msra.mxu0 0.0
    %162 = vmatprep.subr.mxu0 0.0
    %163 = vmatpush2.msra.mxu0 0.0
    %164 = vmatprep.subr.mxu0 0.0
    %165 = vmatpush2.msra.mxu0 0.0
    %166 = vmatprep.subr.mxu0 0.0
    %167 = vmatpush2.msra.mxu0 0.0
    %168 = vmatprep.subr.mxu0 0.0
    %169 = vmatpush2.msra.mxu0 0.0
    %170 = vmatprep.subr.mxu0 0.0
    %171 = vmatpush2.msra.mxu0 0.0
    %172 = vmatprep.subr.mxu0 0.0
    %173 = vmatpush2.msra.mxu0 0.0
    %174 = vmatprep.subr.mxu0 0.0
    %175 = vmatpush2.msra.mxu0 0.0
    %176 = vmatprep.subr.mxu0 0.0
    %177 = vmatpush2.msra.mxu0 0.0
    %178 = vmatprep.mubr.f32.mxu0 0.0
    %179 = vmatmul.mubr.f32.gmra.mxu0 %v108
    %v180 = vpop.f32.mrf.mxu0
    %v181 = vadd.f32 0.0, %v180
    %v182 = vpop.f32.mrf.mxu0
    %183 = vdwg.mxu0
    %vm184 = vcmask 97280
    %v186 = vsel %vm184, %v73, 0
    %v189 = vsel %vm110, %v91, 0
    %191 = vmatprep.subr.mxu0 0.0
    %192 = vmatpush1.msra.mxu0 %v89
    %193 = vmatprep.subr.mxu0 0.0
    %194 = vmatpush1.msra.mxu0 %v88
    %195 = vmatprep.subr.mxu0 0.0
    %196 = vmatpush1.msra.mxu0 %v87
    %197 = vmatprep.subr.mxu0 0.0
    %198 = vmatpush1.msra.mxu0 %v86
    %199 = vmatprep.subr.mxu0 0.0
    %200 = vmatpush1.msra.mxu0 %v85
    %201 = vmatprep.subr.mxu0 0.0
    %202 = vmatpush1.msra.mxu0 %v84
    %203 = vmatprep.subr.mxu0 0.0
    %204 = vmatpush1.msra.mxu0 %v83
    %205 = vmatprep.subr.mxu0 0.0
    %206 = vmatpush1.msra.mxu0 %v82
    %207 = vmatprep.subr.mxu0 0.0
    %208 = vmatpush1.msra.mxu0 %v81
    %209 = vmatprep.subr.mxu0 0.0
    %210 = vmatpush1.msra.mxu0 %v80
    %211 = vmatprep.subr.mxu0 0.0
    %212 = vmatpush1.msra.mxu0 %v79
    %213 = vmatprep.subr.mxu0 0.0
    %214 = vmatpush1.msra.mxu0 %v78
    %215 = vmatprep.subr.mxu0 0.0
    %216 = vmatpush1.msra.mxu0 %v77
    %217 = vmatprep.subr.mxu0 0.0
    %218 = vmatpush1.msra.mxu0 %v76
    %219 = vmatprep.subr.mxu0 0.0
    %220 = vmatpush1.msra.mxu0 %v75
    %221 = vmatprep.subr.mxu0 0.0
    %222 = vmatpush1.msra.mxu0 %v74
    %223 = vmatprep.subr.mxu0 0.0
    %224 = vmatpush2.msra.mxu0 0.0
    %225 = vmatprep.subr.mxu0 0.0
    %226 = vmatpush2.msra.mxu0 0.0
    %227 = vmatprep.subr.mxu0 0.0
    %228 = vmatpush2.msra.mxu0 0.0
    %229 = vmatprep.subr.mxu0 0.0
    %230 = vmatpush2.msra.mxu0 0.0
    %231 = vmatprep.subr.mxu0 0.0
    %232 = vmatpush2.msra.mxu0 0.0
    %233 = vmatprep.subr.mxu0 0.0
    %234 = vmatpush2.msra.mxu0 0.0
    %235 = vmatprep.subr.mxu0 0.0
    %236 = vmatpush2.msra.mxu0 0.0
    %237 = vmatprep.subr.mxu0 0.0
    %238 = vmatpush2.msra.mxu0 0.0
    %239 = vmatprep.subr.mxu0 0.0
    %240 = vmatpush2.msra.mxu0 0.0
    %241 = vmatprep.subr.mxu0 0.0
    %242 = vmatpush2.msra.mxu0 0.0
    %243 = vmatprep.subr.mxu0 0.0
    %244 = vmatpush2.msra.mxu0 0.0
    %245 = vmatprep.subr.mxu0 0.0
    %246 = vmatpush2.msra.mxu0 0.0
    %247 = vmatprep.subr.mxu0 0.0
    %248 = vmatpush2.msra.mxu0 0.0
    %249 = vmatprep.subr.mxu0 0.0
    %250 = vmatpush2.msra.mxu0 0.0
    %251 = vmatprep.subr.mxu0 0.0
    %252 = vmatpush2.msra.mxu0 %v189
    %253 = vmatprep.subr.mxu0 0.0
    %254 = vmatpush2.msra.mxu0 %v90
    %255 = vmatprep.mubr.f32.mxu0 %v186
    %256 = vmatmul.mubr.f32.gmra.mxu0 %v72
    %v257 = vpop.f32.mrf.mxu0
    %v258 = vadd.f32 %v181, %v257
    %v259 = vpop.f32.mrf.mxu0
    %260 = vdwg.mxu0
    %v261 = vld [vmem:[%s4] sm:$0x1]
    %v263 = vlaneseq
    %v264 = vshrl.u32 %v263, 7
    %v265 = vsub.s32 0, %v264
    %v266 = vrot.slane %v261, %v265
    %v268 = vadd.f32 %v258, %v266
    %269 = vst.msk [vmem:[#allocation10] sm:$0xff] %vm106, %v268
    // Predicated region
    $region38: #{tpu_custom_call.1} parent=1 // pred_check
      _
    $region39: #{tpu_custom_call.1} parent=1 // pred_check_branch
      %271 = sbr.rel (0) target = $region41
    $region40: #{tpu_custom_call.1} parent=1 // pred_region
      %s273 = ssub.s32 128, 128
      %274 = vsyncadd [#allocation4], %s273
      %s276 = sshll.u32 [#allocation10], 4
      %s277 = int_to_ptr.vmem [resolvable:$true] %s276
      %279 = dma.vmem_to_hbm [thread:$0]  %s277, 128, %s5, [#allocation4]
    $region41: #{tpu_custom_call.1} parent=1 // pred_fallthru
      _
    // Predicated region
    $region42: #{tpu_custom_call.1} parent=1 // pred_check
      _
    $region43: #{tpu_custom_call.1} parent=1 // pred_check_branch
      %281 = sbr.rel (0) target = $region45
    $region44: #{tpu_custom_call.1} parent=1 // pred_region
      %282 = dma.done [#allocation4], 128
    $region45: #{tpu_custom_call.1} parent=1 // pred_fallthru
      _
    %283 = vsyncpa [#allocation3], 1
    %284 = vsyncpa [#allocation6], 1
    %285 = vsyncpa [#allocation9], 1
    %286 = vsyncpa [#allocation4], 1

</llo_original>
